<compile_context>
chip_gen: v7x
topology: tpu7x:2x2x1
jax: 0.10.0
libtpu: 0.0.40
codegen_flags: <defaults>
</compile_context>

<pallas_src>
import jax
import jax.numpy as jnp
from jax.experimental import pallas as pl
from jax.experimental.pallas import tpu as pltpu


def _resnet_block_kernel(x_ref, s1_ref, t1_ref, w1_ref, b1_ref,
                         s2_ref, t2_ref, w2_ref, b2_ref, o_ref):
    """One grid step: `bt` batch elements, rows flattened into the matmul M dim.

    x_ref : (bt, Lout, 2C) f32  -- row i of an element = [x[2i, :] | x[2i+1, :]]
    w*_ref: (3C, C) bf16        -- fused conv taps, row = k*C + cin
    o_ref : (bt, Lout, C) f32
    """
    bt, l_out, two_c = x_ref.shape
    c = two_c // 2
    m = bt * l_out
    f32 = jnp.float32

    # Row masks marking the first / last pooled position of every batch element
    # inside the flattened (bt*Lout) row space.  They (a) implement the conv
    # pad=1 zero boundary and the max-pool right zero-pad, and (b) stop shifts
    # from leaking across batch elements.
    row = jax.lax.broadcasted_iota(jnp.int32, (m, 1), 0) % l_out
    first_row = row == 0
    last_row = row == (l_out - 1)
    zero_row = jnp.zeros((1, c), f32)

    def shift_up(y):      # result[i] = y[i + 1]; zero at each element's last row
        return jnp.where(last_row, 0.0,
                         jnp.concatenate([y[1:, :], zero_row], axis=0))

    def shift_down(y):    # result[i] = y[i - 1]; zero at each element's first row
        return jnp.where(first_row, 0.0,
                         jnp.concatenate([zero_row, y[:-1, :]], axis=0))

    # ---- MaxPool1d(kernel=3, stride=2) after right zero-pad of 1 ------------
    # Even / odd sequence positions come pre-packed side by side on the lanes;
    # flattening (bt, Lout) into the M dim is a free row-major reshape.
    x_flat = x_ref[...].reshape(m, two_c)
    x_even = x_flat[:, 0:c]                                                # x[2i]
    x_odd = x_flat[:, c:two_c]                                             # x[2i+1]
    xs = jnp.maximum(jnp.maximum(x_even, x_odd), shift_up(x_even))         # x[2i+2] (0 past end)

    # ---- folded eval-mode BN + ReLU + Conv1d(k=3, pad=1), taps fused to K=3C --
    def bn_relu_conv(y, s_ref, t_ref, w_ref, b_ref):
        y = jnp.maximum(y * s_ref[...] + t_ref[...], 0.0)                  # f32 VPU math
        ycat = jnp.concatenate([shift_down(y), y, shift_up(y)], axis=1)    # (M, 3C)
        return (jnp.dot(ycat.astype(w_ref.dtype), w_ref[...],              # bf16 MXU, f32 acc
                        preferred_element_type=f32)
                + b_ref[...])

    h = bn_relu_conv(xs, s1_ref, t1_ref, w1_ref, b1_ref)
    h = bn_relu_conv(h, s2_ref, t2_ref, w2_ref, b2_ref)
    out = (h + xs).astype(o_ref.dtype)                                     # residual add (f32)

    o_ref[...] = out.reshape(bt, l_out, c)


def resnet_block_forward(x_ncl, params, eps=1e-5):
    """DPCNN ResnetBlock forward.  x_ncl: (N, C, L) as in PyTorch Conv1d. Returns (N, C, L//2)."""
    N, C, L = x_ncl.shape
    assert L % 2 == 0, "kernel assumes even sequence length"
    Lout = L // 2

    # NCL -> NLC, then a *free* row-major reshape that packs (x[2i], x[2i+1])
    # into one 2C-wide row so the kernel never needs a strided de-interleave.
    x_pairs = jnp.transpose(x_ncl, (0, 2, 1)).astype(jnp.float32).reshape(N, Lout, 2 * C)

    def fold_bn(g, b, m, v):
        scale = (g / jnp.sqrt(v + eps)).astype(jnp.float32)
        shift = (b - m * scale).astype(jnp.float32)
        return scale.reshape(1, C), shift.reshape(1, C)

    s1, t1 = fold_bn(params['gamma1'], params['beta1'], params['mean1'], params['var1'])
    s2, t2 = fold_bn(params['gamma2'], params['beta2'], params['mean2'], params['var2'])

    def fuse_w(w):  # torch Conv1d weight (Cout, Cin, 3) -> (3*Cin, Cout); bf16 MXU operand
        return jnp.transpose(w, (2, 1, 0)).reshape(3 * C, C).astype(jnp.bfloat16)

    w1f, w2f = fuse_w(params['w1']), fuse_w(params['w2'])
    b1 = params['b1'].reshape(1, C).astype(jnp.float32)
    b2 = params['b2'].reshape(1, C).astype(jnp.float32)

    # Batch elements per grid step: aim for >=256 rows in the matmul M dimension,
    # bounded by N and constrained to divide N.
    bt = max(1, min(N, (256 + Lout - 1) // Lout))
    while N % bt:
        bt -= 1

    vec_spec = pl.BlockSpec((1, C), lambda n: (0, 0))
    w_spec = pl.BlockSpec((3 * C, C), lambda n: (0, 0))

    flops = 2 * (2 * N * Lout * 3 * C * C)                       # two fused k=3 convs
    bytes_accessed = 4 * N * C * (L + Lout) + 2 * (3 * C * C) * 2 + 6 * C * 4

    out_nlc = pl.pallas_call(
        _resnet_block_kernel,
        out_shape=jax.ShapeDtypeStruct((N, Lout, C), jnp.float32),
        grid_spec=pltpu.PrefetchScalarGridSpec(
            num_scalar_prefetch=0,
            grid=(N // bt,),
            in_specs=[
                pl.BlockSpec((bt, Lout, 2 * C), lambda n: (n, 0, 0)),   # packed activations
                vec_spec, vec_spec, w_spec, vec_spec,                   # BN1 scale/shift, W1, b1
                vec_spec, vec_spec, w_spec, vec_spec,                   # BN2 scale/shift, W2, b2
            ],
            out_specs=pl.BlockSpec((bt, Lout, C), lambda n: (n, 0, 0)),
        ),
        compiler_params=pltpu.CompilerParams(
            dimension_semantics=("parallel",),
            vmem_limit_bytes=32 * 1024 * 1024,
        ),
        cost_estimate=pl.CostEstimate(flops=flops, transcendentals=0,
                                      bytes_accessed=bytes_accessed),
    )(x_pairs, s1, t1, w1f, b1, s2, t2, w2f, b2)

    # Back to PyTorch's NCL layout.
    return jnp.transpose(out_nlc, (0, 2, 1))


def ref_forward(x, params, eps=1e-5, conv_dtype=jnp.float32):
    """Pure-JAX reference (eval-mode BN), NCL layout.  conv_dtype mimics the kernel's
    bf16 matmul operands when set to bfloat16 (accumulation stays f32)."""
    N, C, L = x.shape
    Lout = L // 2
    xp = jnp.pad(x, ((0, 0), (0, 0), (0, 1)))
    shortcut = jnp.stack(
        [jnp.max(xp[:, :, 2 * i:2 * i + 3], axis=-1) for i in range(Lout)], axis=-1)

    def bn(y, g, b, m, v):
        return ((y - m[None, :, None]) / jnp.sqrt(v + eps)[None, :, None]
                * g[None, :, None] + b[None, :, None])

    def conv1d(y, w, b):
        out = jax.lax.conv_general_dilated(
            y.astype(conv_dtype), w.astype(conv_dtype), window_strides=(1,),
            padding=[(1, 1)], dimension_numbers=('NCH', 'OIH', 'NCH'),
            preferred_element_type=jnp.float32)
        return out + b[None, :, None]

    h = jax.nn.relu(bn(shortcut, params['gamma1'], params['beta1'], params['mean1'], params['var1']))
    h = conv1d(h, params['w1'], params['b1'])
    h = jax.nn.relu(bn(h, params['gamma2'], params['beta2'], params['mean2'], params['var2']))
    h = conv1d(h, params['w2'], params['b2'])
    return h + shortcut


if __name__ == "__main__":
    N, C, L = 2, 32, 16   # batch, channel_size, sequence length
    key = jax.random.PRNGKey(0)
    ks = jax.random.split(key, 13)
    params = {
        'gamma1': jax.random.uniform(ks[0], (C,), minval=0.5, maxval=1.5),
        'beta1': 0.1 * jax.random.normal(ks[1], (C,)),
        'mean1': 0.1 * jax.random.normal(ks[2], (C,)),
        'var1': jax.random.uniform(ks[3], (C,), minval=0.5, maxval=1.5),
        'w1': 0.1 * jax.random.normal(ks[4], (C, C, 3)),
        'b1': 0.1 * jax.random.normal(ks[5], (C,)),
        'gamma2': jax.random.uniform(ks[6], (C,), minval=0.5, maxval=1.5),
        'beta2': 0.1 * jax.random.normal(ks[7], (C,)),
        'mean2': 0.1 * jax.random.normal(ks[8], (C,)),
        'var2': jax.random.uniform(ks[9], (C,), minval=0.5, maxval=1.5),
        'w2': 0.1 * jax.random.normal(ks[10], (C, C, 3)),
        'b2': 0.1 * jax.random.normal(ks[11], (C,)),
    }
    x = jax.random.normal(ks[12], (N, C, L), dtype=jnp.float32)

    # also exercise the case where the right zero-pad dominates the max-pool window
    for xin in (x, x - 2.0):
        out = jax.block_until_ready(resnet_block_forward(xin, params))
        assert out.shape == (N, C, L // 2), out.shape

        # tight check vs a reference that also uses bf16 conv operands (kernel math)
        err_bf16 = float(jnp.max(jnp.abs(out - ref_forward(xin, params, conv_dtype=jnp.bfloat16))))
        assert err_bf16 < 1e-2, f"max abs err vs bf16 reference {err_bf16}"

        # loose check vs the pure f32 reference (tolerance accounts for bf16 matmul operands)
        err_f32 = float(jnp.max(jnp.abs(out - ref_forward(xin, params))))
        assert err_f32 < 1e-1, f"max abs err vs f32 reference {err_f32}"

    print("KERNEL_OK")
</pallas_src>

<mosaic_0001>
module attributes {stable_mosaic.version = 11 : i64} {
  func.func @_resnet_block_kernel(%arg0: i32, %arg1: memref<2x8x64xf32, #tpu.memory_space<vmem>>, %arg2: memref<1x32xf32, #tpu.memory_space<vmem>>, %arg3: memref<1x32xf32, #tpu.memory_space<vmem>>, %arg4: memref<96x32xbf16, #tpu.memory_space<vmem>>, %arg5: memref<1x32xf32, #tpu.memory_space<vmem>>, %arg6: memref<1x32xf32, #tpu.memory_space<vmem>>, %arg7: memref<1x32xf32, #tpu.memory_space<vmem>>, %arg8: memref<96x32xbf16, #tpu.memory_space<vmem>>, %arg9: memref<1x32xf32, #tpu.memory_space<vmem>>, %arg10: memref<2x8x32xf32, #tpu.memory_space<vmem>>) attributes {dimension_semantics = [#tpu.dimension_semantics<parallel>], iteration_bounds = array<i64: 1>, scalar_prefetch = 0 : i64, scratch_operands = 0 : i64, tpu.core_type = #tpu.core_type<tc>, window_params = [{transform_indices = @transform_0, window_bounds = array<i64: 2, 8, 64>}, {pipeline_mode = #tpu.pipeline_mode<synchronous>, transform_indices = @transform_1, window_bounds = array<i64: 1, 32>}, {pipeline_mode = #tpu.pipeline_mode<synchronous>, transform_indices = @transform_2, window_bounds = array<i64: 1, 32>}, {pipeline_mode = #tpu.pipeline_mode<synchronous>, transform_indices = @transform_3, window_bounds = array<i64: 96, 32>}, {pipeline_mode = #tpu.pipeline_mode<synchronous>, transform_indices = @transform_4, window_bounds = array<i64: 1, 32>}, {pipeline_mode = #tpu.pipeline_mode<synchronous>, transform_indices = @transform_5, window_bounds = array<i64: 1, 32>}, {pipeline_mode = #tpu.pipeline_mode<synchronous>, transform_indices = @transform_6, window_bounds = array<i64: 1, 32>}, {pipeline_mode = #tpu.pipeline_mode<synchronous>, transform_indices = @transform_7, window_bounds = array<i64: 96, 32>}, {pipeline_mode = #tpu.pipeline_mode<synchronous>, transform_indices = @transform_8, window_bounds = array<i64: 1, 32>}, {transform_indices = @transform_9, window_bounds = array<i64: 2, 8, 32>}]} {
    %0 = tpu.iota {dimensions = array<i32: 0>} : vector<16x1xi32>
    %c8_i32 = arith.constant 8 : i32
    %c0_i32 = arith.constant 0 : i32
    %1 = arith.cmpi eq, %c8_i32, %c0_i32 : i32
    %c1_i32 = arith.constant 1 : i32
    %2 = arith.select %1, %c1_i32, %c8_i32 : i32
    %3 = vector.broadcast %2 : i32 to vector<16x1xi32>
    %4 = arith.remsi %0, %3 : vector<16x1xi32>
    %c0_i32_0 = arith.constant 0 : i32
    %5 = vector.broadcast %c0_i32_0 : i32 to vector<16x1xi32>
    %6 = arith.cmpi ne, %4, %5 : vector<16x1xi32>
    %c0_i32_1 = arith.constant 0 : i32
    %7 = vector.broadcast %c0_i32_1 : i32 to vector<16x1xi32>
    %8 = arith.cmpi slt, %4, %7 : vector<16x1xi32>
    %c0_i32_2 = arith.constant 0 : i32
    %9 = arith.cmpi slt, %2, %c0_i32_2 : i32
    %10 = vector.broadcast %9 : i1 to vector<16x1xi1>
    %11 = vector.broadcast %10 : vector<16x1xi1> to vector<16x1xi1>
    %12 = arith.xori %8, %11 : vector<16x1xi1>
    %13 = arith.andi %12, %6 : vector<16x1xi1>
    %14 = vector.broadcast %2 : i32 to vector<16x1xi32>
    %15 = arith.addi %4, %14 : vector<16x1xi32>
    %16 = arith.select %13, %15, %4 : vector<16x1xi1>, vector<16x1xi32>
    %c0_i32_3 = arith.constant 0 : i32
    %17 = vector.broadcast %c0_i32_3 : i32 to vector<16x1xi32>
    %18 = arith.cmpi eq, %16, %17 : vector<16x1xi32>
    %c7_i32 = arith.constant 7 : i32
    %19 = vector.broadcast %c7_i32 : i32 to vector<16x1xi32>
    %20 = arith.cmpi eq, %16, %19 : vector<16x1xi32>
    %cst = arith.constant 0.000000e+00 : f32
    %21 = vector.broadcast %cst : f32 to vector<1x32xf32>
    %c0 = arith.constant 0 : index
    %c0_4 = arith.constant 0 : index
    %c0_5 = arith.constant 0 : index
    %22 = vector.load %arg1[%c0, %c0_4, %c0_5] : memref<2x8x64xf32, #tpu.memory_space<vmem>>, vector<2x8x64xf32>
    %23 = vector.shape_cast %22 : vector<2x8x64xf32> to vector<16x64xf32>
    %24 = vector.extract_strided_slice %23 {offsets = [0, 0], sizes = [16, 32], strides = [1, 1]} : vector<16x64xf32> to vector<16x32xf32>
    %25 = vector.extract_strided_slice %23 {offsets = [0, 32], sizes = [16, 32], strides = [1, 1]} : vector<16x64xf32> to vector<16x32xf32>
    %26 = arith.maximumf %24, %25 : vector<16x32xf32>
    %27 = vector.extract_strided_slice %24 {offsets = [1, 0], sizes = [15, 32], strides = [1, 1]} : vector<16x32xf32> to vector<15x32xf32>
    %28 = tpu.concatenate %27, %21 in 0 : vector<15x32xf32>, vector<1x32xf32> -> vector<16x32xf32>
    %cst_6 = arith.constant 0.000000e+00 : f32
    %29 = vector.shape_cast %20 : vector<16x1xi1> to vector<16x1xi1>
    %30 = vector.broadcast %29 : vector<16x1xi1> to vector<16x32xi1>
    %31 = vector.broadcast %cst_6 : f32 to vector<16x32xf32>
    %32 = arith.select %30, %31, %28 : vector<16x32xi1>, vector<16x32xf32>
    %33 = arith.maximumf %26, %32 : vector<16x32xf32>
    %c0_7 = arith.constant 0 : index
    %c0_8 = arith.constant 0 : index
    %34 = vector.load %arg2[%c0_7, %c0_8] : memref<1x32xf32, #tpu.memory_space<vmem>>, vector<1x32xf32>
    %35 = vector.broadcast %34 : vector<1x32xf32> to vector<16x32xf32>
    %36 = arith.mulf %33, %35 : vector<16x32xf32>
    %c0_9 = arith.constant 0 : index
    %c0_10 = arith.constant 0 : index
    %37 = vector.load %arg3[%c0_9, %c0_10] : memref<1x32xf32, #tpu.memory_space<vmem>>, vector<1x32xf32>
    %38 = vector.broadcast %37 : vector<1x32xf32> to vector<16x32xf32>
    %39 = arith.addf %36, %38 : vector<16x32xf32>
    %cst_11 = arith.constant 0.000000e+00 : f32
    %40 = vector.broadcast %cst_11 : f32 to vector<16x32xf32>
    %41 = arith.maximumf %39, %40 : vector<16x32xf32>
    %42 = vector.extract_strided_slice %41 {offsets = [0, 0], sizes = [15, 32], strides = [1, 1]} : vector<16x32xf32> to vector<15x32xf32>
    %43 = tpu.concatenate %21, %42 in 0 : vector<1x32xf32>, vector<15x32xf32> -> vector<16x32xf32>
    %cst_12 = arith.constant 0.000000e+00 : f32
    %44 = vector.shape_cast %18 : vector<16x1xi1> to vector<16x1xi1>
    %45 = vector.broadcast %44 : vector<16x1xi1> to vector<16x32xi1>
    %46 = vector.broadcast %cst_12 : f32 to vector<16x32xf32>
    %47 = arith.select %45, %46, %43 : vector<16x32xi1>, vector<16x32xf32>
    %48 = vector.extract_strided_slice %41 {offsets = [1, 0], sizes = [15, 32], strides = [1, 1]} : vector<16x32xf32> to vector<15x32xf32>
    %49 = tpu.concatenate %48, %21 in 0 : vector<15x32xf32>, vector<1x32xf32> -> vector<16x32xf32>
    %cst_13 = arith.constant 0.000000e+00 : f32
    %50 = vector.shape_cast %20 : vector<16x1xi1> to vector<16x1xi1>
    %51 = vector.broadcast %50 : vector<16x1xi1> to vector<16x32xi1>
    %52 = vector.broadcast %cst_13 : f32 to vector<16x32xf32>
    %53 = arith.select %51, %52, %49 : vector<16x32xi1>, vector<16x32xf32>
    %54 = tpu.concatenate %47, %41, %53 in 1 : vector<16x32xf32>, vector<16x32xf32>, vector<16x32xf32> -> vector<16x96xf32>
    %55 = arith.truncf %54 : vector<16x96xf32> to vector<16x96xbf16>
    %c0_14 = arith.constant 0 : index
    %c0_15 = arith.constant 0 : index
    %56 = vector.load %arg4[%c0_14, %c0_15] : memref<96x32xbf16, #tpu.memory_space<vmem>>, vector<96x32xbf16>
    %cst_16 = arith.constant dense<0.000000e+00> : vector<16x32xf32>
    %57 = tpu.matmul %55, %56, %cst_16 {dimension_numbers = #tpu.dot_dimension_numbers<[1], [0], [0], [1], [0, 0, 1, 1], [], []>} : vector<16x96xbf16>, vector<96x32xbf16>, vector<16x32xf32> -> vector<16x32xf32>
    %c0_17 = arith.constant 0 : index
    %c0_18 = arith.constant 0 : index
    %58 = vector.load %arg5[%c0_17, %c0_18] : memref<1x32xf32, #tpu.memory_space<vmem>>, vector<1x32xf32>
    %59 = vector.broadcast %58 : vector<1x32xf32> to vector<16x32xf32>
    %60 = arith.addf %57, %59 : vector<16x32xf32>
    %c0_19 = arith.constant 0 : index
    %c0_20 = arith.constant 0 : index
    %61 = vector.load %arg6[%c0_19, %c0_20] : memref<1x32xf32, #tpu.memory_space<vmem>>, vector<1x32xf32>
    %62 = vector.broadcast %61 : vector<1x32xf32> to vector<16x32xf32>
    %63 = arith.mulf %60, %62 : vector<16x32xf32>
    %c0_21 = arith.constant 0 : index
    %c0_22 = arith.constant 0 : index
    %64 = vector.load %arg7[%c0_21, %c0_22] : memref<1x32xf32, #tpu.memory_space<vmem>>, vector<1x32xf32>
    %65 = vector.broadcast %64 : vector<1x32xf32> to vector<16x32xf32>
    %66 = arith.addf %63, %65 : vector<16x32xf32>
    %cst_23 = arith.constant 0.000000e+00 : f32
    %67 = vector.broadcast %cst_23 : f32 to vector<16x32xf32>
    %68 = arith.maximumf %66, %67 : vector<16x32xf32>
    %69 = vector.extract_strided_slice %68 {offsets = [0, 0], sizes = [15, 32], strides = [1, 1]} : vector<16x32xf32> to vector<15x32xf32>
    %70 = tpu.concatenate %21, %69 in 0 : vector<1x32xf32>, vector<15x32xf32> -> vector<16x32xf32>
    %cst_24 = arith.constant 0.000000e+00 : f32
    %71 = vector.shape_cast %18 : vector<16x1xi1> to vector<16x1xi1>
    %72 = vector.broadcast %71 : vector<16x1xi1> to vector<16x32xi1>
    %73 = vector.broadcast %cst_24 : f32 to vector<16x32xf32>
    %74 = arith.select %72, %73, %70 : vector<16x32xi1>, vector<16x32xf32>
    %75 = vector.extract_strided_slice %68 {offsets = [1, 0], sizes = [15, 32], strides = [1, 1]} : vector<16x32xf32> to vector<15x32xf32>
    %76 = tpu.concatenate %75, %21 in 0 : vector<15x32xf32>, vector<1x32xf32> -> vector<16x32xf32>
    %cst_25 = arith.constant 0.000000e+00 : f32
    %77 = vector.shape_cast %20 : vector<16x1xi1> to vector<16x1xi1>
    %78 = vector.broadcast %77 : vector<16x1xi1> to vector<16x32xi1>
    %79 = vector.broadcast %cst_25 : f32 to vector<16x32xf32>
    %80 = arith.select %78, %79, %76 : vector<16x32xi1>, vector<16x32xf32>
    %81 = tpu.concatenate %74, %68, %80 in 1 : vector<16x32xf32>, vector<16x32xf32>, vector<16x32xf32> -> vector<16x96xf32>
    %82 = arith.truncf %81 : vector<16x96xf32> to vector<16x96xbf16>
    %c0_26 = arith.constant 0 : index
    %c0_27 = arith.constant 0 : index
    %83 = vector.load %arg8[%c0_26, %c0_27] : memref<96x32xbf16, #tpu.memory_space<vmem>>, vector<96x32xbf16>
    %cst_28 = arith.constant dense<0.000000e+00> : vector<16x32xf32>
    %84 = tpu.matmul %82, %83, %cst_28 {dimension_numbers = #tpu.dot_dimension_numbers<[1], [0], [0], [1], [0, 0, 1, 1], [], []>} : vector<16x96xbf16>, vector<96x32xbf16>, vector<16x32xf32> -> vector<16x32xf32>
    %c0_29 = arith.constant 0 : index
    %c0_30 = arith.constant 0 : index
    %85 = vector.load %arg9[%c0_29, %c0_30] : memref<1x32xf32, #tpu.memory_space<vmem>>, vector<1x32xf32>
    %86 = vector.broadcast %85 : vector<1x32xf32> to vector<16x32xf32>
    %87 = arith.addf %84, %86 : vector<16x32xf32>
    %88 = arith.addf %87, %33 : vector<16x32xf32>
    %89 = vector.shape_cast %88 : vector<16x32xf32> to vector<2x8x32xf32>
    %c0_31 = arith.constant 0 : index
    %c0_32 = arith.constant 0 : index
    %c0_33 = arith.constant 0 : index
    %90 = vector.load %arg10[%c0_31, %c0_32, %c0_33] : memref<2x8x32xf32, #tpu.memory_space<vmem>>, vector<2x8x32xf32>
    tpu.vector_store %arg10[%c0_31, %c0_32, %c0_33], %89 {strides = array<i32>} : memref<2x8x32xf32, #tpu.memory_space<vmem>>, vector<2x8x32xf32>,
    return
  }
  func.func @transform_0(%arg0: i32) -> (i32, i32, i32) {
    %c0_i32 = arith.constant 0 : i32
    %c0_i32_0 = arith.constant 0 : i32
    %c0_i32_1 = arith.constant 0 : i32
    return %arg0, %c0_i32, %c0_i32_0 : i32, i32, i32
  }
  func.func @transform_1(%arg0: i32) -> (i32, i32) {
    %c0_i32 = arith.constant 0 : i32
    %c0_i32_0 = arith.constant 0 : i32
    %c0_i32_1 = arith.constant 0 : i32
    return %c0_i32, %c0_i32_0 : i32, i32
  }
  func.func @transform_2(%arg0: i32) -> (i32, i32) {
    %c0_i32 = arith.constant 0 : i32
    %c0_i32_0 = arith.constant 0 : i32
    %c0_i32_1 = arith.constant 0 : i32
    return %c0_i32, %c0_i32_0 : i32, i32
  }
  func.func @transform_3(%arg0: i32) -> (i32, i32) {
    %c0_i32 = arith.constant 0 : i32
    %c0_i32_0 = arith.constant 0 : i32
    %c0_i32_1 = arith.constant 0 : i32
    return %c0_i32, %c0_i32_0 : i32, i32
  }
  func.func @transform_4(%arg0: i32) -> (i32, i32) {
    %c0_i32 = arith.constant 0 : i32
    %c0_i32_0 = arith.constant 0 : i32
    %c0_i32_1 = arith.constant 0 : i32
    return %c0_i32, %c0_i32_0 : i32, i32
  }
  func.func @transform_5(%arg0: i32) -> (i32, i32) {
    %c0_i32 = arith.constant 0 : i32
    %c0_i32_0 = arith.constant 0 : i32
    %c0_i32_1 = arith.constant 0 : i32
    return %c0_i32, %c0_i32_0 : i32, i32
  }
  func.func @transform_6(%arg0: i32) -> (i32, i32) {
    %c0_i32 = arith.constant 0 : i32
    %c0_i32_0 = arith.constant 0 : i32
    %c0_i32_1 = arith.constant 0 : i32
    return %c0_i32, %c0_i32_0 : i32, i32
  }
  func.func @transform_7(%arg0: i32) -> (i32, i32) {
    %c0_i32 = arith.constant 0 : i32
    %c0_i32_0 = arith.constant 0 : i32
    %c0_i32_1 = arith.constant 0 : i32
    return %c0_i32, %c0_i32_0 : i32, i32
  }
  func.func @transform_8(%arg0: i32) -> (i32, i32) {
    %c0_i32 = arith.constant 0 : i32
    %c0_i32_0 = arith.constant 0 : i32
    %c0_i32_1 = arith.constant 0 : i32
    return %c0_i32, %c0_i32_0 : i32, i32
  }
  func.func @transform_9(%arg0: i32) -> (i32, i32, i32) {
    %c0_i32 = arith.constant 0 : i32
    %c0_i32_0 = arith.constant 0 : i32
    %c0_i32_1 = arith.constant 0 : i32
    return %arg0, %c0_i32, %c0_i32_0 : i32, i32, i32
  }
}

</mosaic_0001>

<llo_original>
// kernel: tpu_custom_call.1
$region0: #{tpu_custom_call.1}
  #allocation0 [shape = 'u32[]', space=smem, size = 0x4, offset = 0x4, fixed_abs, tag = 'smem constant byte address 0x4 - core index']
  #allocation1 [shape = 'u32[144,128]{1,0:T(1,128)}', space=vmem, size = 0x12000, scoped, tag = 'internal scratch']
  %s0 = inlined_call_operand.vmem [shape: f32[2,8,64], index: 0, kind: input, shape index: {}]
  %s1 = inlined_call_operand.vmem [shape: f32[1,32], index: 1, kind: input, shape index: {}]
  %s2 = inlined_call_operand.vmem [shape: f32[1,32], index: 2, kind: input, shape index: {}]
  %s3 = inlined_call_operand.vmem [shape: bf16[96,32], index: 3, kind: input, shape index: {}]
  %s4 = inlined_call_operand.vmem [shape: f32[1,32], index: 4, kind: input, shape index: {}]
  %s5 = inlined_call_operand.vmem [shape: f32[1,32], index: 5, kind: input, shape index: {}]
  %s6 = inlined_call_operand.vmem [shape: f32[1,32], index: 6, kind: input, shape index: {}]
  %s7 = inlined_call_operand.vmem [shape: bf16[96,32], index: 7, kind: input, shape index: {}]
  %s8 = inlined_call_operand.vmem [shape: f32[1,32], index: 8, kind: input, shape index: {}]
  %s9 = inlined_call_operand.hbm [shape: f32[2,8,32], index: 9, kind: output, shape index: {}]
  %s10 = sld [smem:[#allocation0]]
  $region46: #{tpu_custom_call.1} parent=0
    _
  %s12 = ssub.s32 1, %s10
  %s13 = scalar_select 0, %s12, %s10
  $region1: #{tpu_custom_call.1} parent=0
    #allocation2 [shape = 'u8[8192]{0}', space=vmem, size = 0x2000, scoped, tag = 'output window, operand 0, single buffered']
    #allocation3 [shape = 's32[1]{0}', space=sflag, size = 0x4, scoped, tag = 'scoped memory for tpu_custom_call.1']
    %14 = vsyncpa [#allocation3], 0
    // Predicated region
    $region2: #{tpu_custom_call.1} parent=1 // pred_check
      _
    $region3: #{tpu_custom_call.1} parent=1 // pred_check_branch
      %16 = sbr.rel (0) target = $region5
    $region4: #{tpu_custom_call.1} parent=1 // pred_region
      _
    $region5: #{tpu_custom_call.1} parent=1 // pred_fallthru
      _
    // Predicated region
    $region6: #{tpu_custom_call.1} parent=1 // pred_check
      _
    $region7: #{tpu_custom_call.1} parent=1 // pred_check_branch
      %18 = sbr.rel (0) target = $region9
    $region8: #{tpu_custom_call.1} parent=1 // pred_region
      _
    $region9: #{tpu_custom_call.1} parent=1 // pred_fallthru
      _
    // Predicated region
    $region10: #{tpu_custom_call.1} parent=1 // pred_check
      _
    $region11: #{tpu_custom_call.1} parent=1 // pred_check_branch
      %20 = sbr.rel (0) target = $region13
    $region12: #{tpu_custom_call.1} parent=1 // pred_region
      _
    $region13: #{tpu_custom_call.1} parent=1 // pred_fallthru
      _
    // Predicated region
    $region14: #{tpu_custom_call.1} parent=1 // pred_check
      _
    $region15: #{tpu_custom_call.1} parent=1 // pred_check_branch
      %22 = sbr.rel (0) target = $region17
    $region16: #{tpu_custom_call.1} parent=1 // pred_region
      _
    $region17: #{tpu_custom_call.1} parent=1 // pred_fallthru
      _
    // Predicated region
    $region18: #{tpu_custom_call.1} parent=1 // pred_check
      _
    $region19: #{tpu_custom_call.1} parent=1 // pred_check_branch
      %24 = sbr.rel (0) target = $region21
    $region20: #{tpu_custom_call.1} parent=1 // pred_region
      _
    $region21: #{tpu_custom_call.1} parent=1 // pred_fallthru
      _
    // Predicated region
    $region22: #{tpu_custom_call.1} parent=1 // pred_check
      _
    $region23: #{tpu_custom_call.1} parent=1 // pred_check_branch
      %26 = sbr.rel (0) target = $region25
    $region24: #{tpu_custom_call.1} parent=1 // pred_region
      _
    $region25: #{tpu_custom_call.1} parent=1 // pred_fallthru
      _
    // Predicated region
    $region26: #{tpu_custom_call.1} parent=1 // pred_check
      _
    $region27: #{tpu_custom_call.1} parent=1 // pred_check_branch
      %28 = sbr.rel (0) target = $region29
    $region28: #{tpu_custom_call.1} parent=1 // pred_region
      _
    $region29: #{tpu_custom_call.1} parent=1 // pred_fallthru
      _
    // Predicated region
    $region30: #{tpu_custom_call.1} parent=1 // pred_check
      _
    $region31: #{tpu_custom_call.1} parent=1 // pred_check_branch
      %30 = sbr.rel (0) target = $region33
    $region32: #{tpu_custom_call.1} parent=1 // pred_region
      _
    $region33: #{tpu_custom_call.1} parent=1 // pred_fallthru
      _
    // Predicated region
    $region34: #{tpu_custom_call.1} parent=1 // pred_check
      _
    $region35: #{tpu_custom_call.1} parent=1 // pred_check_branch
      %32 = sbr.rel (0) target = $region37
    $region36: #{tpu_custom_call.1} parent=1 // pred_region
      _
    $region37: #{tpu_custom_call.1} parent=1 // pred_fallthru
      _
    %v34 = vlaneseq
    %v35 = vshrl.u32 %v34, 7
    %v36 = vadd.s32 %v35, 8
    %vm37 = vcmp.lt.s32.totalorder %v35, 0
    %v38 = vsub.s32 0, %v35
    %v39 = vsel %vm37, %v38, %v35
    %v40 = vshrl.u32 %v39, 3
    %v41 = vand.u32 %v39, 7
    %v42 = vsub.s32 0, %v41
    %v43 = vsel %vm37, %v42, %v41
    %vm44 = vcmp.lt.s32.totalorder %v36, 0
    %v45 = vsub.s32 0, %v36
    %v46 = vsel %vm44, %v45, %v36
    %v47 = vshrl.u32 %v46, 3
    %v48 = vand.u32 %v46, 7
    %v49 = vsub.s32 0, %v48
    %v50 = vsel %vm44, %v49, %v48
    %vm51 = vcmp.ne.s32.totalorder %v43, 0
    %vm52 = vcmp.ne.s32.totalorder %v50, 0
    %vm53 = vcmp.lt.s32.totalorder %v43, 0
    %vm54 = vcmp.lt.s32.totalorder %v50, 0
    %vm55 = vmand %vm53, %vm51
    %vm56 = vmand %vm54, %vm52
    %v57 = vadd.s32 %v43, 8
    %v58 = vadd.s32 %v50, 8
    %v59 = vsel %vm55, %v57, %v43
    %v60 = vsel %vm56, %v58, %v50
    %vm61 = vcmp.eq.s32.totalorder %v59, 0
    %vm62 = vcmp.eq.s32.totalorder %v60, 0
    %vm63 = vcmp.eq.s32.totalorder %v59, 7
    %vm64 = vcmp.eq.s32.totalorder %v60, 7
    %v65 = vld [vmem:[%s0] sm:$0xff]
    %v66 = vld [vmem:[%s0 + $0x8] sm:$0xff]
    %69 = vrot.lane.b32.xlu0 %v65, 96
    %v70 = vpop.permute.xlu0 %69
    %71 = vrot.lane.b32.xlu0 %v66, 96
    %v72 = vpop.permute.xlu0 %71
    %v75 = vmax.f32 %v65, %v70
    %v76 = vmax.f32 %v66, %v72
    %vm77 = vcmask 1046528
    %v78 = vrot.slane %v65, 1
    %v79 = vrot.slane %v66, 1
    %v80 = vsel %vm77, %v78, %v79
    %v83 = vsel %vm77, %v79, 0.0
    %v84 = vsel %vm63, 1, 0
    %v85 = vsel %vm64, 1, 0
    %vm86 = vcmp.eq.s32.totalorder %v84, 1
    %vm87 = vcmp.eq.s32.totalorder %v85, 1
    %v88 = vsel %vm86, 0.0, %v80
    %v89 = vsel %vm87, 0.0, %v83
    %v90 = vmax.f32 %v75, %v88
    %v91 = vmax.f32 %v76, %v89
    %v92 = vld [vmem:[%s1] sm:$0x1]
    %v94 = vlaneseq
    %v95 = vshrl.u32 %v94, 7
    %v96 = vsub.s32 0, %v95
    %v97 = vrot.slane %v92, %v96
    %v99 = vmul.f32 %v90, %v97
    %v100 = vmul.f32 %v91, %v97
    %v101 = vld [vmem:[%s2] sm:$0x1]
    %v103 = vlaneseq
    %v104 = vshrl.u32 %v103, 7
    %v105 = vsub.s32 0, %v104
    %v106 = vrot.slane %v101, %v105
    %v108 = vadd.f32 %v99, %v106
    %v109 = vadd.f32 %v100, %v106
    %v110 = vmax.f32 %v108, 0.0
    %v111 = vmax.f32 %v109, 0.0
    %vm114 = vcmask 1040384
    %v115 = vrot.slane %v110, 7
    %v116 = vrot.slane %v111, 7
    %v117 = vsel %vm114, %v115, %v116
    %v120 = vsel %vm114, 0.0, %v115
    %v121 = vsel %vm61, 1, 0
    %v122 = vsel %vm62, 1, 0
    %vm123 = vcmp.eq.s32.totalorder %v121, 1
    %vm124 = vcmp.eq.s32.totalorder %v122, 1
    %v125 = vsel %vm123, 0.0, %v120
    %v126 = vsel %vm124, 0.0, %v117
    %v127 = vrot.slane %v110, 1
    %v128 = vrot.slane %v111, 1
    %v129 = vsel %vm77, %v127, %v128
    %v132 = vsel %vm77, %v128, 0.0
    %v133 = vsel %vm86, 0.0, %v129
    %v134 = vsel %vm87, 0.0, %v132
    %135 = vrot.lane.b32.xlu0 %v110, 32
    %v136 = vpop.permute.xlu0 %135
    %137 = vrot.lane.b32.xlu0 %v111, 32
    %v138 = vpop.permute.xlu0 %137
    %143 = vrot.lane.b32.xlu0 %v133, 64
    %v144 = vpop.permute.xlu0 %143
    %145 = vrot.lane.b32.xlu0 %v134, 64
    %v146 = vpop.permute.xlu0 %145
    %vm149 = vcmask 261120
    %v150 = vsel %vm149, %v125, %v136
    %v151 = vsel %vm149, %v126, %v138
    %vm152 = vcmask 523264
    %v153 = vsel %vm152, %v150, %v144
    %v154 = vsel %vm152, %v151, %v146
    %v155 = vpack.c.bf16 %v154, %v153
    %v156 = vld [vmem:[%s3] sm:$0xf]
    %v157 = vld [vmem:[%s3 + $0x4] sm:$0xf]
    %v158 = vld [vmem:[%s3 + $0x8] sm:$0xf]
    %v159 = vld [vmem:[%s3 + $0xc] sm:$0xf]
    %v160 = vld [vmem:[%s3 + $0x10] sm:$0xf]
    %v161 = vld [vmem:[%s3 + $0x14] sm:$0xf]
    %v162 = vld [vmem:[%s3 + $0x18] sm:$0xf]
    %v163 = vld [vmem:[%s3 + $0x1c] sm:$0xf]
    %v164 = vld [vmem:[%s3 + $0x20] sm:$0xf]
    %v165 = vld [vmem:[%s3 + $0x24] sm:$0xf]
    %v166 = vld [vmem:[%s3 + $0x28] sm:$0xf]
    %v167 = vld [vmem:[%s3 + $0x2c] sm:$0xf]
    %v168 = vld [vmem:[%s4] sm:$0x1]
    %v170 = vlaneseq
    %v171 = vshrl.u32 %v170, 7
    %v172 = vsub.s32 0, %v171
    %v173 = vrot.slane %v168, %v172
    %v187 = vunpack.c.l.b16 %v156
    %v188 = vunpack.c.l.b16 %v157
    %v189 = vunpack.c.l.b16 %v158
    %v190 = vunpack.c.l.b16 %v159
    %v191 = vunpack.c.l.b16 %v160
    %v192 = vunpack.c.l.b16 %v161
    %v193 = vunpack.c.l.b16 %v162
    %v194 = vunpack.c.l.b16 %v163
    %v195 = vunpack.c.l.b16 %v164
    %v196 = vunpack.c.l.b16 %v165
    %v197 = vunpack.c.l.b16 %v166
    %v198 = vunpack.c.l.b16 %v167
    %v199 = vpack.c.b16 %v188, %v187
    %v200 = vpack.c.b16 %v190, %v189
    %v201 = vpack.c.b16 %v192, %v191
    %v202 = vpack.c.b16 %v194, %v193
    %v203 = vpack.c.b16 %v196, %v195
    %v204 = vpack.c.b16 %v198, %v197
    %vm211 = vcmask 785408
    %v213 = vsel %vm211, %v155, 0
    %215 = vmatprep.subr.bf16.mxu0 0
    %216 = vmatpush1.bf16.msra.mxu0 %v199
    %217 = vmatprep.subr.bf16.mxu0 0
    %218 = vmatpush1.bf16.msra.mxu0 %v200
    %219 = vmatprep.subr.bf16.mxu0 0
    %220 = vmatpush1.bf16.msra.mxu0 %v201
    %221 = vmatprep.subr.bf16.mxu0 0
    %222 = vmatpush1.bf16.msra.mxu0 %v202
    %223 = vmatprep.subr.bf16.mxu0 0
    %224 = vmatpush1.bf16.msra.mxu0 %v203
    %225 = vmatprep.subr.bf16.mxu0 0
    %226 = vmatpush1.bf16.msra.mxu0 %v204
    %227 = vmatprep.subr.bf16.mxu0 0
    %228 = vmatpush1.bf16.msra.mxu0 0
    %229 = vmatprep.subr.bf16.mxu0 0
    %230 = vmatpush1.bf16.msra.mxu0 0
    %231 = vmatprep.subr.bf16.mxu0 0
    %232 = vmatpush1.bf16.msra.mxu0 0
    %233 = vmatprep.subr.bf16.mxu0 0
    %234 = vmatpush1.bf16.msra.mxu0 0
    %235 = vmatprep.subr.bf16.mxu0 0
    %236 = vmatpush1.bf16.msra.mxu0 0
    %237 = vmatprep.subr.bf16.mxu0 0
    %238 = vmatpush1.bf16.msra.mxu0 0
    %239 = vmatprep.subr.bf16.mxu0 0
    %240 = vmatpush1.bf16.msra.mxu0 0
    %241 = vmatprep.subr.bf16.mxu0 0
    %242 = vmatpush1.bf16.msra.mxu0 0
    %243 = vmatprep.subr.bf16.mxu0 0
    %244 = vmatpush1.bf16.msra.mxu0 0
    %245 = vmatprep.subr.bf16.mxu0 0
    %246 = vmatpush1.bf16.msra.mxu0 0
    %247 = vmatprep.mubr.bf16.mxu0 0
    %248 = vmatmul.mubr.bf16.gmra.mrb[0].mxu0 %v213
    %v249 = vpop.f32.mrb[0].mxu0
    %v250 = vadd.f32 %v173, %v249
    %v251 = vpop.f32.mrb[0].mxu0
    %v252 = vpop.f32.mrb[0].mxu0
    %v253 = vadd.f32 %v173, %v252
    %v254 = vpop.f32.mrb[0].mxu0
    %255 = vdwg.mxu0
    %v256 = vld [vmem:[%s5] sm:$0x1]
    %v258 = vlaneseq
    %v259 = vshrl.u32 %v258, 7
    %v260 = vsub.s32 0, %v259
    %v261 = vrot.slane %v256, %v260
    %v263 = vmul.f32 %v250, %v261
    %v264 = vmul.f32 %v253, %v261
    %v265 = vld [vmem:[%s6] sm:$0x1]
    %v267 = vlaneseq
    %v268 = vshrl.u32 %v267, 7
    %v269 = vsub.s32 0, %v268
    %v270 = vrot.slane %v265, %v269
    %v272 = vadd.f32 %v263, %v270
    %v273 = vadd.f32 %v264, %v270
    %v274 = vmax.f32 %v272, 0.0
    %v275 = vmax.f32 %v273, 0.0
    %v278 = vrot.slane %v274, 7
    %v279 = vrot.slane %v275, 7
    %v280 = vsel %vm114, %v278, %v279
    %v283 = vsel %vm114, 0.0, %v278
    %v284 = vsel %vm123, 0.0, %v283
    %v285 = vsel %vm124, 0.0, %v280
    %v286 = vrot.slane %v274, 1
    %v287 = vrot.slane %v275, 1
    %v288 = vsel %vm77, %v286, %v287
    %v291 = vsel %vm77, %v287, 0.0
    %v292 = vsel %vm86, 0.0, %v288
    %v293 = vsel %vm87, 0.0, %v291
    %294 = vrot.lane.b32.xlu0 %v274, 32
    %v295 = vpop.permute.xlu0 %294
    %296 = vrot.lane.b32.xlu0 %v275, 32
    %v297 = vpop.permute.xlu0 %296
    %302 = vrot.lane.b32.xlu0 %v292, 64
    %v303 = vpop.permute.xlu0 %302
    %304 = vrot.lane.b32.xlu0 %v293, 64
    %v305 = vpop.permute.xlu0 %304
    %v308 = vsel %vm149, %v284, %v295
    %v309 = vsel %vm149, %v285, %v297
    %v310 = vsel %vm152, %v308, %v303
    %v311 = vsel %vm152, %v309, %v305
    %v312 = vpack.c.bf16 %v311, %v310
    %v313 = vld [vmem:[%s7] sm:$0xf]
    %v314 = vld [vmem:[%s7 + $0x4] sm:$0xf]
    %v315 = vld [vmem:[%s7 + $0x8] sm:$0xf]
    %v316 = vld [vmem:[%s7 + $0xc] sm:$0xf]
    %v317 = vld [vmem:[%s7 + $0x10] sm:$0xf]
    %v318 = vld [vmem:[%s7 + $0x14] sm:$0xf]
    %v319 = vld [vmem:[%s7 + $0x18] sm:$0xf]
    %v320 = vld [vmem:[%s7 + $0x1c] sm:$0xf]
    %v321 = vld [vmem:[%s7 + $0x20] sm:$0xf]
    %v322 = vld [vmem:[%s7 + $0x24] sm:$0xf]
    %v323 = vld [vmem:[%s7 + $0x28] sm:$0xf]
    %v324 = vld [vmem:[%s7 + $0x2c] sm:$0xf]
    %v325 = vld [vmem:[%s8] sm:$0x1]
    %v327 = vlaneseq
    %v328 = vshrl.u32 %v327, 7
    %v329 = vsub.s32 0, %v328
    %v330 = vrot.slane %v325, %v329
    %v344 = vunpack.c.l.b16 %v313
    %v345 = vunpack.c.l.b16 %v314
    %v346 = vunpack.c.l.b16 %v315
    %v347 = vunpack.c.l.b16 %v316
    %v348 = vunpack.c.l.b16 %v317
    %v349 = vunpack.c.l.b16 %v318
    %v350 = vunpack.c.l.b16 %v319
    %v351 = vunpack.c.l.b16 %v320
    %v352 = vunpack.c.l.b16 %v321
    %v353 = vunpack.c.l.b16 %v322
    %v354 = vunpack.c.l.b16 %v323
    %v355 = vunpack.c.l.b16 %v324
    %v356 = vpack.c.b16 %v345, %v344
    %v357 = vpack.c.b16 %v347, %v346
    %v358 = vpack.c.b16 %v349, %v348
    %v359 = vpack.c.b16 %v351, %v350
    %v360 = vpack.c.b16 %v353, %v352
    %v361 = vpack.c.b16 %v355, %v354
    %v369 = vsel %vm211, %v312, 0
    %371 = vmatprep.subr.bf16.mxu0 0
    %372 = vmatpush1.bf16.msra.mxu0 %v356
    %373 = vmatprep.subr.bf16.mxu0 0
    %374 = vmatpush1.bf16.msra.mxu0 %v357
    %375 = vmatprep.subr.bf16.mxu0 0
    %376 = vmatpush1.bf16.msra.mxu0 %v358
    %377 = vmatprep.subr.bf16.mxu0 0
    %378 = vmatpush1.bf16.msra.mxu0 %v359
    %379 = vmatprep.subr.bf16.mxu0 0
    %380 = vmatpush1.bf16.msra.mxu0 %v360
    %381 = vmatprep.subr.bf16.mxu0 0
    %382 = vmatpush1.bf16.msra.mxu0 %v361
    %383 = vmatprep.subr.bf16.mxu0 0
    %384 = vmatpush1.bf16.msra.mxu0 0
    %385 = vmatprep.subr.bf16.mxu0 0
    %386 = vmatpush1.bf16.msra.mxu0 0
    %387 = vmatprep.subr.bf16.mxu0 0
    %388 = vmatpush1.bf16.msra.mxu0 0
    %389 = vmatprep.subr.bf16.mxu0 0
    %390 = vmatpush1.bf16.msra.mxu0 0
    %391 = vmatprep.subr.bf16.mxu0 0
    %392 = vmatpush1.bf16.msra.mxu0 0
    %393 = vmatprep.subr.bf16.mxu0 0
    %394 = vmatpush1.bf16.msra.mxu0 0
    %395 = vmatprep.subr.bf16.mxu0 0
    %396 = vmatpush1.bf16.msra.mxu0 0
    %397 = vmatprep.subr.bf16.mxu0 0
    %398 = vmatpush1.bf16.msra.mxu0 0
    %399 = vmatprep.subr.bf16.mxu0 0
    %400 = vmatpush1.bf16.msra.mxu0 0
    %401 = vmatprep.subr.bf16.mxu0 0
    %402 = vmatpush1.bf16.msra.mxu0 0
    %403 = vmatprep.mubr.bf16.mxu0 0
    %404 = vmatmul.mubr.bf16.gmra.mrb[0].mxu0 %v369
    %v405 = vpop.f32.mrb[0].mxu0
    %v406 = vadd.f32 %v330, %v405
    %v407 = vpop.f32.mrb[0].mxu0
    %v408 = vpop.f32.mrb[0].mxu0
    %v409 = vadd.f32 %v330, %v408
    %v410 = vpop.f32.mrb[0].mxu0
    %411 = vdwg.mxu0
    %v412 = vadd.f32 %v406, %v90
    %v413 = vadd.f32 %v409, %v91
    %414 = vst.msk [vmem:[#allocation2] sm:$0xff] %vm149, %v412
    %415 = vst.msk [vmem:[#allocation2 + $0x8] sm:$0xff] %vm149, %v413
    // Predicated region
    $region38: #{tpu_custom_call.1} parent=1 // pred_check
      _
    $region39: #{tpu_custom_call.1} parent=1 // pred_check_branch
      %417 = sbr.rel (0) target = $region41
    $region40: #{tpu_custom_call.1} parent=1 // pred_region
      %s419 = ssub.s32 256, 256
      %420 = vsyncadd [#allocation3], %s419
      %s421 = sshll.u32 [#allocation2], 4
      %s422 = int_to_ptr.vmem [resolvable:$true] %s421
      %427 = dma.vmem_to_hbm [thread:$0]  %s422, 256, %s9, [#allocation3], 128, 128, 8
    $region41: #{tpu_custom_call.1} parent=1 // pred_fallthru
      _
    // Predicated region
    $region42: #{tpu_custom_call.1} parent=1 // pred_check
      _
    $region43: #{tpu_custom_call.1} parent=1 // pred_check_branch
      %429 = sbr.rel (0) target = $region45
    $region44: #{tpu_custom_call.1} parent=1 // pred_region
      %430 = dma.done [#allocation3], 256
    $region45: #{tpu_custom_call.1} parent=1 // pred_fallthru
      _
    %431 = vsyncpa [#allocation3], 1

</llo_original>
